<compile_context>
chip_gen: v5e
topology: v5e:2x2
jax: 0.10.0
libtpu: 0.0.40
codegen_flags: <defaults>
</compile_context>

<pallas_src>
import functools

import jax
import jax.numpy as jnp
from jax.experimental import pallas as pl
from jax.experimental.pallas import tpu as pltpu


def _round_up(x, m):
    return (x + m - 1) // m * m


def actor_kernel(x_ref, p_ref, o_ref, *, dims):
    """x_ref: [TB, state_dim] tile of states.
    p_ref: [R, C] packed parameter slab (whole array, VMEM-resident, C % 128 == 0).
    o_ref: [TB, C] lane-dense output tile (cols >= action_dim are exactly 0)."""
    S, C, r1, r2, r3, rb = dims

    x = x_ref[...]
    # Static, full-lane-width slices into the packed slab (row offsets are
    # multiples of 8).  Padded columns/rows of every slice are zero.
    w1 = p_ref[r1:r1 + S, :]          # [S, C]
    w2 = p_ref[r2:r2 + C, :]          # [C, C]
    w3 = p_ref[r3:r3 + C, :]          # [C, C]
    b1 = p_ref[rb:rb + 1, :]          # [1, C]
    b2 = p_ref[rb + 1:rb + 2, :]      # [1, C]
    b3 = p_ref[rb + 2:rb + 3, :]      # [1, C]

    # Layer 1: Linear + ReLU  (padded lanes: relu(0 + 0) = 0)
    h1 = jnp.maximum(jnp.dot(x, w1, preferred_element_type=jnp.float32) + b1, 0.0)
    # Layer 2: Linear + ReLU  (zero rows of w2 eat the zero padded lanes of h1)
    h2 = jnp.maximum(jnp.dot(h1, w2, preferred_element_type=jnp.float32) + b2, 0.0)
    # Layer 3: Linear + Tanh, stored lane-dense at width C (tanh(0) = 0 in pad)
    o_ref[...] = jnp.tanh(jnp.dot(h2, w3, preferred_element_type=jnp.float32) + b3)


def pack_actor_params(params):
    """One-time packing of PyTorch-layout params (w: [out, in], b: [out]) into a
    single lane-dense f32 slab so the kernel issues ONE parameter DMA.
    NOTE: correctness of the wrapper [:, :A] slice relies on the padded
    columns/rows of this slab staying zero -- re-zero it if the buffer is ever
    donated/reused."""
    w1, b1 = params["w1"], params["b1"]   # [H, S], [H]
    w2, b2 = params["w2"], params["b2"]   # [H, H], [H]
    w3, b3 = params["w3"], params["b3"]   # [A, H], [A]
    H, S = w1.shape
    A = w3.shape[0]

    C = _round_up(max(H, A), 128)   # lane-dense slab / activation / output width
    Sp = _round_up(S, 8)            # keep every section's row offset 8-aligned
    r1, r2, r3 = 0, Sp, Sp + C
    rb = Sp + 2 * C
    R = rb + 8                      # one 8-sublane block for the three bias rows

    P = jnp.zeros((R, C), jnp.float32)
    P = P.at[r1:r1 + S, 0:H].set(w1.T.astype(jnp.float32))
    P = P.at[r2:r2 + H, 0:H].set(w2.T.astype(jnp.float32))
    P = P.at[r3:r3 + H, 0:A].set(w3.T.astype(jnp.float32))
    P = P.at[rb, 0:H].set(b1.astype(jnp.float32))
    P = P.at[rb + 1, 0:H].set(b2.astype(jnp.float32))
    P = P.at[rb + 2, 0:A].set(b3.astype(jnp.float32))

    meta = {"S": S, "H": H, "A": A, "C": C, "kernel_dims": (S, C, r1, r2, r3, rb)}
    return P, meta


def actor_forward(state, packed, meta, *, max_tile=512):
    """state: [B, state_dim] f32.  packed/meta: output of pack_actor_params."""
    S, A, C = meta["S"], meta["A"], meta["C"]
    B = state.shape[0]

    if B <= max_tile:
        # Single grid step: block == full array (no (8,128) constraint, no pad),
        # one state DMA, zero per-step overhead.
        TB, Bp = B, B
    else:
        # Large batches: big 512-row tiles (multiple of 8), parallel grid axis.
        TB = max_tile
        Bp = _round_up(B, TB)

    x = state if Bp == B else jnp.pad(state, ((0, Bp - B), (0, 0)))

    kern = functools.partial(actor_kernel, dims=meta["kernel_dims"])
    out = pl.pallas_call(
        kern,
        out_shape=jax.ShapeDtypeStruct((Bp, C), jnp.float32),
        grid=(Bp // TB,),
        in_specs=[
            # State: blocked over batch (single block when grid == (1,)).
            pl.BlockSpec((TB, S), lambda i: (i, 0)),
            # Packed params: whole array, constant block index -> VMEM-resident.
            pl.BlockSpec(packed.shape, lambda i: (0, 0)),
        ],
        # Lane-dense output store (C is a multiple of 128 -> unmasked vst).
        out_specs=pl.BlockSpec((TB, C), lambda i: (i, 0)),
        compiler_params=pltpu.CompilerParams(
            dimension_semantics=("parallel",),  # shards batch across v7x's 2 TCs
        ),
    )(x, packed)

    return out[:B, :A]


def init_actor_params(key, state_dim, action_dim, hidden_dim):
    """Deterministic init mimicking PyTorch nn.Linear default
    (uniform(-1/sqrt(fan_in), 1/sqrt(fan_in))), stored in torch layout."""
    ks = jax.random.split(key, 6)

    def lin(kw, kb, fan_in, fan_out):
        bound = 1.0 / jnp.sqrt(fan_in)
        w = jax.random.uniform(kw, (fan_out, fan_in), jnp.float32, -bound, bound)
        b = jax.random.uniform(kb, (fan_out,), jnp.float32, -bound, bound)
        return w, b

    w1, b1 = lin(ks[0], ks[1], state_dim, hidden_dim)
    w2, b2 = lin(ks[2], ks[3], hidden_dim, hidden_dim)
    w3, b3 = lin(ks[4], ks[5], hidden_dim, action_dim)
    return {"w1": w1, "b1": b1, "w2": w2, "b2": b2, "w3": w3, "b3": b3}


if __name__ == "__main__":
    key = jax.random.PRNGKey(0)
    k_state, k_params, k_state2 = jax.random.split(key, 3)

    batch = 64
    state_dim = 16
    action_dim = 4
    hidden_dim = 32

    state = jax.random.normal(k_state, (batch, state_dim), jnp.float32)
    params = init_actor_params(k_params, state_dim, action_dim, hidden_dim)

    # One-time packing (outside the rollout loop / forward call).
    packed, meta = pack_actor_params(params)
    packed = jax.block_until_ready(packed)

    fwd = jax.jit(lambda s: actor_forward(s, packed, meta))

    # Pure-JAX reference against the PyTorch-layout params.
    def ref(x, p):
        h = jnp.maximum(x @ p["w1"].T + p["b1"], 0.0)
        h = jnp.maximum(h @ p["w2"].T + p["b2"], 0.0)
        return jnp.tanh(h @ p["w3"].T + p["b3"])

    # 1) Small batch -> single-tile path (grid=(1,), no padding).
    out = jax.block_until_ready(fwd(state))
    expected = ref(state, params)
    assert out.shape == (batch, action_dim)
    assert jnp.allclose(out, expected, atol=2e-5, rtol=1e-5)

    # 2) Large ragged batch -> multi-tile (TB=512) + padded-tail path.
    big_batch = 1040
    state_big = jax.random.normal(k_state2, (big_batch, state_dim), jnp.float32)
    out_big = jax.block_until_ready(fwd(state_big))
    expected_big = ref(state_big, params)
    assert out_big.shape == (big_batch, action_dim)
    assert jnp.allclose(out_big, expected_big, atol=2e-5, rtol=1e-5)

    print("KERNEL_OK")
</pallas_src>

<mosaic_0001>
module attributes {stable_mosaic.version = 11 : i64} {
  func.func @actor_kernel(%arg0: i32, %arg1: memref<64x16xf32, #tpu.memory_space<vmem>>, %arg2: memref<280x128xf32, #tpu.memory_space<vmem>>, %arg3: memref<64x128xf32, #tpu.memory_space<vmem>>) attributes {dimension_semantics = [#tpu.dimension_semantics<parallel>], iteration_bounds = array<i64: 1>, scalar_prefetch = 0 : i64, scratch_operands = 0 : i64, tpu.core_type = #tpu.core_type<tc>, window_params = [{transform_indices = @transform_0, window_bounds = array<i64: 64, 16>}, {pipeline_mode = #tpu.pipeline_mode<synchronous>, transform_indices = @transform_1, window_bounds = array<i64: 280, 128>}, {transform_indices = @transform_2, window_bounds = array<i64: 64, 128>}]} {
    %c0 = arith.constant 0 : index
    %c0_0 = arith.constant 0 : index
    %0 = vector.load %arg1[%c0, %c0_0] : memref<64x16xf32, #tpu.memory_space<vmem>>, vector<64x16xf32>
    %c0_1 = arith.constant 0 : index
    %c0_2 = arith.constant 0 : index
    %1 = vector.load %arg2[%c0_1, %c0_2] : memref<280x128xf32, #tpu.memory_space<vmem>>, vector<16x128xf32>
    %c16 = arith.constant 16 : index
    %c0_3 = arith.constant 0 : index
    %2 = vector.load %arg2[%c16, %c0_3] : memref<280x128xf32, #tpu.memory_space<vmem>>, vector<128x128xf32>
    %c144 = arith.constant 144 : index
    %c0_4 = arith.constant 0 : index
    %3 = vector.load %arg2[%c144, %c0_4] : memref<280x128xf32, #tpu.memory_space<vmem>>, vector<128x128xf32>
    %c272 = arith.constant 272 : index
    %c0_5 = arith.constant 0 : index
    %4 = vector.load %arg2[%c272, %c0_5] : memref<280x128xf32, #tpu.memory_space<vmem>>, vector<1x128xf32>
    %c273 = arith.constant 273 : index
    %c0_6 = arith.constant 0 : index
    %5 = vector.load %arg2[%c273, %c0_6] : memref<280x128xf32, #tpu.memory_space<vmem>>, vector<1x128xf32>
    %c274 = arith.constant 274 : index
    %c0_7 = arith.constant 0 : index
    %6 = vector.load %arg2[%c274, %c0_7] : memref<280x128xf32, #tpu.memory_space<vmem>>, vector<1x128xf32>
    %cst = arith.constant dense<0.000000e+00> : vector<64x128xf32>
    %7 = tpu.matmul %0, %1, %cst {dimension_numbers = #tpu.dot_dimension_numbers<[1], [0], [0], [1], [0, 0, 1, 1], [], []>} : vector<64x16xf32>, vector<16x128xf32>, vector<64x128xf32> -> vector<64x128xf32>
    %8 = vector.broadcast %4 : vector<1x128xf32> to vector<64x128xf32>
    %9 = arith.addf %7, %8 : vector<64x128xf32>
    %cst_8 = arith.constant 0.000000e+00 : f32
    %10 = vector.broadcast %cst_8 : f32 to vector<64x128xf32>
    %11 = arith.maximumf %9, %10 : vector<64x128xf32>
    %cst_9 = arith.constant dense<0.000000e+00> : vector<64x128xf32>
    %12 = tpu.matmul %11, %2, %cst_9 {dimension_numbers = #tpu.dot_dimension_numbers<[1], [0], [0], [1], [0, 0, 1, 1], [], []>} : vector<64x128xf32>, vector<128x128xf32>, vector<64x128xf32> -> vector<64x128xf32>
    %13 = vector.broadcast %5 : vector<1x128xf32> to vector<64x128xf32>
    %14 = arith.addf %12, %13 : vector<64x128xf32>
    %cst_10 = arith.constant 0.000000e+00 : f32
    %15 = vector.broadcast %cst_10 : f32 to vector<64x128xf32>
    %16 = arith.maximumf %14, %15 : vector<64x128xf32>
    %cst_11 = arith.constant dense<0.000000e+00> : vector<64x128xf32>
    %17 = tpu.matmul %16, %3, %cst_11 {dimension_numbers = #tpu.dot_dimension_numbers<[1], [0], [0], [1], [0, 0, 1, 1], [], []>} : vector<64x128xf32>, vector<128x128xf32>, vector<64x128xf32> -> vector<64x128xf32>
    %18 = vector.broadcast %6 : vector<1x128xf32> to vector<64x128xf32>
    %19 = arith.addf %17, %18 : vector<64x128xf32>
    %20 = math.tanh %19 : vector<64x128xf32>
    %c0_12 = arith.constant 0 : index
    %c0_13 = arith.constant 0 : index
    %21 = vector.load %arg3[%c0_12, %c0_13] : memref<64x128xf32, #tpu.memory_space<vmem>>, vector<64x128xf32>
    tpu.vector_store %arg3[%c0_12, %c0_13], %20 {strides = array<i32>} : memref<64x128xf32, #tpu.memory_space<vmem>>, vector<64x128xf32>,
    return
  }
  func.func @transform_0(%arg0: i32) -> (i32, i32) {
    %c0_i32 = arith.constant 0 : i32
    %c0_i32_0 = arith.constant 0 : i32
    return %arg0, %c0_i32 : i32, i32
  }
  func.func @transform_1(%arg0: i32) -> (i32, i32) {
    %c0_i32 = arith.constant 0 : i32
    %c0_i32_0 = arith.constant 0 : i32
    %c0_i32_1 = arith.constant 0 : i32
    return %c0_i32, %c0_i32_0 : i32, i32
  }
  func.func @transform_2(%arg0: i32) -> (i32, i32) {
    %c0_i32 = arith.constant 0 : i32
    %c0_i32_0 = arith.constant 0 : i32
    return %arg0, %c0_i32 : i32, i32
  }
}

</mosaic_0001>

<llo_original>
// kernel: _lambda_.1
$region0: #{_lambda_.1}
  #allocation0 [shape = 'u32[]', space=smem, size = 0x4, offset = 0x4, fixed_abs, tag = 'smem constant byte address 0x4 - core index']
  #allocation1 [shape = 'u32[72,128]{1,0:T(1,128)}', space=vmem, size = 0x9000, scoped, tag = 'internal scratch']
  %s0 = inlined_call_operand.vmem [shape: f32[64,16], index: 0, kind: input, shape index: {}]
  %s1 = inlined_call_operand.hbm [shape: f32[280,128], index: 1, kind: input, shape index: {}]
  %s2 = inlined_call_operand.vmem [shape: f32[64,128], index: 2, kind: output, shape index: {}]
  %s3 = sld [smem:[#allocation0]]
  $region22: #{_lambda_.1} parent=0
    _
  %s5 = ssub.s32 1, %s3
  %s6 = scalar_select 0, %s5, %s3
  $region1: #{_lambda_.1} parent=0
    #allocation2 [shape = 'u8[143360]{0}', space=vmem, size = 0x23000, scoped, tag = 'input window, operand 1, single buffered']
    #allocation3 [shape = 's32[1]{0}', space=sflag, size = 0x4, scoped, tag = 'scoped memory for _lambda_.1']
    %7 = vsyncpa [#allocation3], 0
    // Predicated region
    $region2: #{_lambda_.1} parent=1 // pred_check
      _
    $region3: #{_lambda_.1} parent=1 // pred_check_branch
      %9 = sbr.rel (0) target = $region5
    $region4: #{_lambda_.1} parent=1 // pred_region
      _
    $region5: #{_lambda_.1} parent=1 // pred_fallthru
      _
    // Predicated region
    $region6: #{_lambda_.1} parent=1 // pred_check
      _
    $region7: #{_lambda_.1} parent=1 // pred_check_branch
      %11 = sbr.rel (0) target = $region9
    $region8: #{_lambda_.1} parent=1 // pred_region
      %13 = vsyncadd [#allocation3], 0
      %s14 = sshll.u32 %s1, 4
      %s15 = int_to_ptr.hbm [resolvable:$true] %s14
      %s16 = sshll.u32 [#allocation2], 4
      %s17 = int_to_ptr.vmem [resolvable:$true] %s16
      %22 = dma.hbm_to_vmem [thread:$0]  %s15, 4480, %s17, [#allocation3], 128, 128, 8
    $region9: #{_lambda_.1} parent=1 // pred_fallthru
      _
    // Predicated region
    $region10: #{_lambda_.1} parent=1 // pred_check
      _
    $region11: #{_lambda_.1} parent=1 // pred_check_branch
      %24 = sbr.rel (0) target = $region13
    $region12: #{_lambda_.1} parent=1 // pred_region
      %26 = dma.done [#allocation3], 4480
    $region13: #{_lambda_.1} parent=1 // pred_fallthru
      _
    %v27 = vld [vmem:[%s0] sm:$0xff]
    %v28 = vld [vmem:[%s0 + $0x8] sm:$0xff]
    %v29 = vld [vmem:[%s0 + $0x10] sm:$0xff]
    %v30 = vld [vmem:[%s0 + $0x18] sm:$0xff]
    %v31 = vld [vmem:[%s0 + $0x20] sm:$0xff]
    %v32 = vld [vmem:[%s0 + $0x28] sm:$0xff]
    %v33 = vld [vmem:[%s0 + $0x30] sm:$0xff]
    %v34 = vld [vmem:[%s0 + $0x38] sm:$0xff]
    %v35 = vld [vmem:[#allocation2] sm:$0xff]
    %v36 = vld [vmem:[#allocation2 + $0x8] sm:$0xff]
    %v37 = vld [vmem:[#allocation2 + $0x10] sm:$0xff]
    %v38 = vld [vmem:[#allocation2 + $0x18] sm:$0xff]
    %v39 = vld [vmem:[#allocation2 + $0x20] sm:$0xff]
    %v40 = vld [vmem:[#allocation2 + $0x28] sm:$0xff]
    %v41 = vld [vmem:[#allocation2 + $0x30] sm:$0xff]
    %v42 = vld [vmem:[#allocation2 + $0x38] sm:$0xff]
    %v43 = vld [vmem:[#allocation2 + $0x40] sm:$0xff]
    %v44 = vld [vmem:[#allocation2 + $0x48] sm:$0xff]
    %v45 = vld [vmem:[#allocation2 + $0x50] sm:$0xff]
    %v46 = vld [vmem:[#allocation2 + $0x58] sm:$0xff]
    %v47 = vld [vmem:[#allocation2 + $0x60] sm:$0xff]
    %v48 = vld [vmem:[#allocation2 + $0x68] sm:$0xff]
    %v49 = vld [vmem:[#allocation2 + $0x70] sm:$0xff]
    %v50 = vld [vmem:[#allocation2 + $0x78] sm:$0xff]
    %v51 = vld [vmem:[#allocation2 + $0x80] sm:$0xff]
    %v52 = vld [vmem:[#allocation2 + $0x88] sm:$0xff]
    %v53 = vld [vmem:[#allocation2 + $0x90] sm:$0xff]
    %v54 = vld [vmem:[#allocation2 + $0x98] sm:$0xff]
    %v55 = vld [vmem:[#allocation2 + $0xa0] sm:$0xff]
    %v56 = vld [vmem:[#allocation2 + $0xa8] sm:$0xff]
    %v57 = vld [vmem:[#allocation2 + $0xb0] sm:$0xff]
    %v58 = vld [vmem:[#allocation2 + $0xb8] sm:$0xff]
    %v59 = vld [vmem:[#allocation2 + $0xc0] sm:$0xff]
    %v60 = vld [vmem:[#allocation2 + $0xc8] sm:$0xff]
    %v61 = vld [vmem:[#allocation2 + $0xd0] sm:$0xff]
    %v62 = vld [vmem:[#allocation2 + $0xd8] sm:$0xff]
    %v63 = vld [vmem:[#allocation2 + $0xe0] sm:$0xff]
    %v64 = vld [vmem:[#allocation2 + $0xe8] sm:$0xff]
    %v65 = vld [vmem:[#allocation2 + $0xf0] sm:$0xff]
    %v66 = vld [vmem:[#allocation2 + $0xf8] sm:$0xff]
    %v67 = vld [vmem:[#allocation2 + $0x100] sm:$0xff]
    %v68 = vld [vmem:[#allocation2 + $0x108] sm:$0xff]
    %v69 = vld [vmem:[#allocation2 + $0x110] sm:$0x1]
    %v70 = vld [vmem:[#allocation2 + $0x111] sm:$0x1]
    %v71 = vld [vmem:[#allocation2 + $0x112] sm:$0x1]
    %v72 = vperm.slane %v69, 0
    %vm73 = vcmask 130048
    %v75 = vsel %vm73, %v27, 0
    %v78 = vsel %vm73, %v28, 0
    %v81 = vsel %vm73, %v29, 0
    %v84 = vsel %vm73, %v30, 0
    %v87 = vsel %vm73, %v31, 0
    %v90 = vsel %vm73, %v32, 0
    %v93 = vsel %vm73, %v33, 0
    %v96 = vsel %vm73, %v34, 0
    %98 = vmatpush.msra.mxu0 0.0
    %99 = vmatpush.msra.mxu0 0.0
    %100 = vmatpush.msra.mxu0 0.0
    %101 = vmatpush.msra.mxu0 0.0
    %102 = vmatpush.msra.mxu0 0.0
    %103 = vmatpush.msra.mxu0 0.0
    %104 = vmatpush.msra.mxu0 0.0
    %105 = vmatpush.msra.mxu0 0.0
    %106 = vmatpush.msra.mxu0 0.0
    %107 = vmatpush.msra.mxu0 0.0
    %108 = vmatpush.msra.mxu0 0.0
    %109 = vmatpush.msra.mxu0 0.0
    %110 = vmatpush.msra.mxu0 0.0
    %111 = vmatpush.msra.mxu0 0.0
    %112 = vmatpush.msra.mxu0 %v36
    %113 = vmatpush.msra.mxu0 %v35
    %114 = vmatmul.f32.gmra.mxu0 %v75
    %v115 = vpop.f32.mrf.mxu0
    %v116 = vadd.f32 %v72, %v115
    %117 = vmatmul.f32.gmra.mxu0 %v78
    %v118 = vpop.f32.mrf.mxu0
    %v119 = vadd.f32 %v72, %v118
    %120 = vmatmul.f32.gmra.mxu0 %v81
    %v121 = vpop.f32.mrf.mxu0
    %v122 = vadd.f32 %v72, %v121
    %123 = vmatmul.f32.gmra.mxu0 %v84
    %v124 = vpop.f32.mrf.mxu0
    %v125 = vadd.f32 %v72, %v124
    %126 = vmatmul.f32.gmra.mxu0 %v87
    %v127 = vpop.f32.mrf.mxu0
    %v128 = vadd.f32 %v72, %v127
    %129 = vmatmul.f32.gmra.mxu0 %v90
    %v130 = vpop.f32.mrf.mxu0
    %v131 = vadd.f32 %v72, %v130
    %132 = vmatmul.f32.gmra.mxu0 %v93
    %v133 = vpop.f32.mrf.mxu0
    %v134 = vadd.f32 %v72, %v133
    %135 = vmatmul.f32.gmra.mxu0 %v96
    %v136 = vpop.f32.mrf.mxu0
    %v137 = vadd.f32 %v72, %v136
    %138 = vdwg.mxu0
    %v139 = vmax.f32 %v116, 0.0
    %v140 = vmax.f32 %v119, 0.0
    %v141 = vmax.f32 %v122, 0.0
    %v142 = vmax.f32 %v125, 0.0
    %v143 = vmax.f32 %v128, 0.0
    %v144 = vmax.f32 %v131, 0.0
    %v145 = vmax.f32 %v134, 0.0
    %v146 = vmax.f32 %v137, 0.0
    %v147 = vperm.slane %v70, 0
    %148 = vmatpush.msra.mxu0 %v52
    %149 = vmatpush.msra.mxu0 %v51
    %150 = vmatpush.msra.mxu0 %v50
    %151 = vmatpush.msra.mxu0 %v49
    %152 = vmatpush.msra.mxu0 %v48
    %153 = vmatpush.msra.mxu0 %v47
    %154 = vmatpush.msra.mxu0 %v46
    %155 = vmatpush.msra.mxu0 %v45
    %156 = vmatpush.msra.mxu0 %v44
    %157 = vmatpush.msra.mxu0 %v43
    %158 = vmatpush.msra.mxu0 %v42
    %159 = vmatpush.msra.mxu0 %v41
    %160 = vmatpush.msra.mxu0 %v40
    %161 = vmatpush.msra.mxu0 %v39
    %162 = vmatpush.msra.mxu0 %v38
    %163 = vmatpush.msra.mxu0 %v37
    %164 = vmatmul.f32.gmra.mxu0 %v139
    %v165 = vpop.f32.mrf.mxu0
    %v166 = vadd.f32 %v147, %v165
    %167 = vmatmul.f32.gmra.mxu0 %v140
    %v168 = vpop.f32.mrf.mxu0
    %v169 = vadd.f32 %v147, %v168
    %170 = vmatmul.f32.gmra.mxu0 %v141
    %v171 = vpop.f32.mrf.mxu0
    %v172 = vadd.f32 %v147, %v171
    %173 = vmatmul.f32.gmra.mxu0 %v142
    %v174 = vpop.f32.mrf.mxu0
    %v175 = vadd.f32 %v147, %v174
    %176 = vmatmul.f32.gmra.mxu0 %v143
    %v177 = vpop.f32.mrf.mxu0
    %v178 = vadd.f32 %v147, %v177
    %179 = vmatmul.f32.gmra.mxu0 %v144
    %v180 = vpop.f32.mrf.mxu0
    %v181 = vadd.f32 %v147, %v180
    %182 = vmatmul.f32.gmra.mxu0 %v145
    %v183 = vpop.f32.mrf.mxu0
    %v184 = vadd.f32 %v147, %v183
    %185 = vmatmul.f32.gmra.mxu0 %v146
    %v186 = vpop.f32.mrf.mxu0
    %v187 = vadd.f32 %v147, %v186
    %188 = vdwg.mxu0
    %v189 = vmax.f32 %v166, 0.0
    %v190 = vmax.f32 %v169, 0.0
    %v191 = vmax.f32 %v172, 0.0
    %v192 = vmax.f32 %v175, 0.0
    %v193 = vmax.f32 %v178, 0.0
    %v194 = vmax.f32 %v181, 0.0
    %v195 = vmax.f32 %v184, 0.0
    %v196 = vmax.f32 %v187, 0.0
    %v197 = vperm.slane %v71, 0
    %198 = vmatpush.msra.mxu0 %v68
    %199 = vmatpush.msra.mxu0 %v67
    %200 = vmatpush.msra.mxu0 %v66
    %201 = vmatpush.msra.mxu0 %v65
    %202 = vmatpush.msra.mxu0 %v64
    %203 = vmatpush.msra.mxu0 %v63
    %204 = vmatpush.msra.mxu0 %v62
    %205 = vmatpush.msra.mxu0 %v61
    %206 = vmatpush.msra.mxu0 %v60
    %207 = vmatpush.msra.mxu0 %v59
    %208 = vmatpush.msra.mxu0 %v58
    %209 = vmatpush.msra.mxu0 %v57
    %210 = vmatpush.msra.mxu0 %v56
    %211 = vmatpush.msra.mxu0 %v55
    %212 = vmatpush.msra.mxu0 %v54
    %213 = vmatpush.msra.mxu0 %v53
    %214 = vmatmul.f32.gmra.mxu0 %v189
    %v215 = vpop.f32.mrf.mxu0
    %v216 = vadd.f32 %v197, %v215
    %217 = vmatmul.f32.gmra.mxu0 %v190
    %v218 = vpop.f32.mrf.mxu0
    %v219 = vadd.f32 %v197, %v218
    %220 = vmatmul.f32.gmra.mxu0 %v191
    %v221 = vpop.f32.mrf.mxu0
    %v222 = vadd.f32 %v197, %v221
    %223 = vmatmul.f32.gmra.mxu0 %v192
    %v224 = vpop.f32.mrf.mxu0
    %v225 = vadd.f32 %v197, %v224
    %226 = vmatmul.f32.gmra.mxu0 %v193
    %v227 = vpop.f32.mrf.mxu0
    %v228 = vadd.f32 %v197, %v227
    %229 = vmatmul.f32.gmra.mxu0 %v194
    %v230 = vpop.f32.mrf.mxu0
    %v231 = vadd.f32 %v197, %v230
    %232 = vmatmul.f32.gmra.mxu0 %v195
    %v233 = vpop.f32.mrf.mxu0
    %v234 = vadd.f32 %v197, %v233
    %235 = vmatmul.f32.gmra.mxu0 %v196
    %v236 = vpop.f32.mrf.mxu0
    %v237 = vadd.f32 %v197, %v236
    %238 = vdwg.mxu0
    %v239 = vtanh.pop %v216
    %v240 = vtanh.pop %v219
    %v241 = vtanh.pop %v222
    %v242 = vtanh.pop %v225
    %v243 = vtanh.pop %v228
    %v244 = vtanh.pop %v231
    %v245 = vtanh.pop %v234
    %v246 = vtanh.pop %v237
    %247 = vst [vmem:[%s2] sm:$0xff] %v239
    %248 = vst [vmem:[%s2 + $0x8] sm:$0xff] %v240
    %249 = vst [vmem:[%s2 + $0x10] sm:$0xff] %v241
    %250 = vst [vmem:[%s2 + $0x18] sm:$0xff] %v242
    %251 = vst [vmem:[%s2 + $0x20] sm:$0xff] %v243
    %252 = vst [vmem:[%s2 + $0x28] sm:$0xff] %v244
    %253 = vst [vmem:[%s2 + $0x30] sm:$0xff] %v245
    %254 = vst [vmem:[%s2 + $0x38] sm:$0xff] %v246
    // Predicated region
    $region14: #{_lambda_.1} parent=1 // pred_check
      _
    $region15: #{_lambda_.1} parent=1 // pred_check_branch
      %256 = sbr.rel (0) target = $region17
    $region16: #{_lambda_.1} parent=1 // pred_region
      _
    $region17: #{_lambda_.1} parent=1 // pred_fallthru
      _
    // Predicated region
    $region18: #{_lambda_.1} parent=1 // pred_check
      _
    $region19: #{_lambda_.1} parent=1 // pred_check_branch
      %258 = sbr.rel (0) target = $region21
    $region20: #{_lambda_.1} parent=1 // pred_region
      _
    $region21: #{_lambda_.1} parent=1 // pred_fallthru
      _
    %259 = vsyncpa [#allocation3], 1

</llo_original>
